<compile_context>
chip_gen: v7x
topology: tpu7x:2x2x1
jax: 0.10.0
libtpu: 0.0.40
codegen_flags: <defaults>
</compile_context>

<pallas_src>
import jax
import jax.numpy as jnp
from jax.experimental import pallas as pl
from jax.experimental.pallas import tpu as pltpu


# --------------------------------------------------------------------------
# Helpers
# --------------------------------------------------------------------------
def _sublane_multiple(itemsize):
    """Row-tile alignment so packed sub-32-bit rows stay sublane-dense."""
    if itemsize >= 4:
        return 8
    if itemsize == 2:
        return 16
    return 32


def _largest_aligned_divisor(total, align, cap):
    """Largest d with d % align == 0, total % d == 0, d <= cap (None if none)."""
    cap = min(cap, total)
    d = (cap // align) * align
    while d >= align:
        if total % d == 0:
            return d
        d -= align
    return None


def _vmem_limit_bytes():
    """Generation-aware scoped-VMEM limit (leave headroom under physical)."""
    try:
        info = pltpu.get_tpu_info()
        cap = int(getattr(info, "vmem_capacity_bytes", 0) or 0)
    except Exception:
        cap = 0
    if cap and cap <= 64 * 1024 * 1024:        # v7x-class: 64 MiB physical
        return 44 * 1024 * 1024
    if cap:                                    # v5e / v6e: 128 MiB physical
        return 64 * 1024 * 1024
    return 40 * 1024 * 1024                    # unknown: safe everywhere


def _pick_rows_path_a(N, F, sub, budget, per_elem):
    """Largest legal row tile for the (N, F) view that fits the VMEM budget."""
    max_rows = budget // max(F * per_elem, 1)
    if max_rows >= N:
        return N
    return _largest_aligned_divisor(N, sub, max_rows)


def _maybe_split_rows(total_rows, bn, sub, min_steps=2):
    """Halve the row tile (if it stays legal) until there are >= min_steps
    grid steps, so both TensorCores on megacore chips get work."""
    while total_rows // bn < min_steps:
        half = bn // 2
        if half >= sub and half % sub == 0 and total_rows % half == 0:
            bn = half
        else:
            break
    return bn


# --------------------------------------------------------------------------
# Kernel
# --------------------------------------------------------------------------
def _make_hemis_kernel(M, half, split_axis):
    """Elementwise mean / unbiased variance over M modality blocks.

    mean goes into the first `half` slots of `split_axis` of the output block,
    var into the remaining slots (both as plain dense slice stores).
    """
    inv_m = 1.0 / M
    inv_m1 = 1.0 / (M - 1) if M > 1 else None

    def kernel(*refs):
        o_ref = refs[M]

        # Pass 1: running sum (f32 accumulation regardless of input dtype).
        s = refs[0][...].astype(jnp.float32)
        for i in range(1, M):
            s = s + refs[i][...].astype(jnp.float32)
        mean = s * jnp.float32(inv_m)

        # Pass 2: re-read the VMEM refs (cheap: 3 vld slots) for squared devs,
        # instead of keeping M f32 copies live across both passes.
        ssq = jnp.zeros_like(mean)
        for i in range(M):
            d = refs[i][...].astype(jnp.float32) - mean
            ssq = ssq + d * d

        if inv_m1 is not None:
            var = ssq * jnp.float32(inv_m1)
        else:
            # torch.var (unbiased) of a single observation is NaN; match it.
            var = jnp.full_like(ssq, jnp.nan)

        if split_axis == 0:
            o_ref[:half, :] = mean.astype(o_ref.dtype)
            o_ref[half:, :] = var.astype(o_ref.dtype)
        else:
            o_ref[:, :half] = mean.astype(o_ref.dtype)
            o_ref[:, half:] = var.astype(o_ref.dtype)

    return kernel


# --------------------------------------------------------------------------
# Wrapper
# --------------------------------------------------------------------------
def hemis_abstraction_block(x_list):
    """x_list: list of M arrays, each (N, C, H, W). Returns (N, 2C, H, W)."""
    M = len(x_list)
    if M == 0:
        raise ValueError("need at least one modality")
    N, C, H, W = x_list[0].shape
    dtype = x_list[0].dtype
    for xi in x_list[1:]:
        if xi.shape != (N, C, H, W) or xi.dtype != dtype:
            raise ValueError("all modalities must share shape and dtype")

    HW = H * W
    F = C * HW
    itemsize = dtype.itemsize
    sub = _sublane_multiple(itemsize)

    vmem_limit = _vmem_limit_bytes()
    budget = int(vmem_limit * 0.7)
    # Per input-block element: M double-buffered input blocks + a double-
    # buffered output block of 2x size, plus ~5 live f32 temporaries.
    per_elem = (2 * M + 4) * itemsize + 20

    # Path A: (N, F) view, out (N, 2F) — preferred when the whole feature axis
    #         fits in one block with a legal row tile.
    # Path B: (N*C, HW) view, one sample per row-block, out (N*2C, HW) —
    #         used for small batches (better sublane occupancy) or when F is
    #         too large for a single block.  Requires C to be sublane-aligned
    #         (or N == 1) so the (C, bf) block is legal.
    bn_a = _pick_rows_path_a(N, F, sub, budget, per_elem)
    path_b_legal = (C % sub == 0) or (N == 1)
    prefer_b = path_b_legal and (N < sub) and (C >= sub) and (HW >= 128)

    use_a = (bn_a is not None) and not prefer_b
    if bn_a is None and not path_b_legal:
        # TODO(synk): neither dense layout fits the VMEM budget legally (huge
        # C*H*W with C not sublane-aligned); fall back to a full-batch Path A
        # block and rely on the scoped-VMEM limit.
        bn_a = N
        use_a = True

    if use_a:
        xs = [jnp.reshape(xi, (N, F)) for xi in x_list]
        bn = _maybe_split_rows(N, bn_a, sub)
        assert N % bn == 0, (N, bn)
        grid = (N // bn,)
        in_specs = [pl.BlockSpec((bn, F), lambda i: (i, 0)) for _ in range(M)]
        out_specs = pl.BlockSpec((bn, 2 * F), lambda i: (i, 0))
        out_shape = jax.ShapeDtypeStruct((N, 2 * F), dtype)
        kernel = _make_hemis_kernel(M, half=F, split_axis=1)
        dims = ("parallel",)
    else:
        xs = [jnp.reshape(xi, (N * C, HW)) for xi in x_list]
        cap_lanes = min(8192, max(budget // max(C * per_elem, 1), 128))
        if HW <= cap_lanes:
            bf = HW
        else:
            bf = _largest_aligned_divisor(HW, 128, cap_lanes)
            if bf is None:
                # TODO(synk): H*W has no 128-aligned divisor under the VMEM
                # cap; wrapper-side padding of H*W would be the robust fix.
                bf = HW
        # Keep >= 2 grid steps when trivially possible (megacore).
        if N * (HW // bf) < 2 and bf % 256 == 0:
            bf //= 2
        assert HW % bf == 0, (HW, bf)
        grid = (N, HW // bf)
        in_specs = [pl.BlockSpec((C, bf), lambda n, j: (n, j)) for _ in range(M)]
        out_specs = pl.BlockSpec((2 * C, bf), lambda n, j: (n, j))
        out_shape = jax.ShapeDtypeStruct((2 * N * C, HW), dtype)
        kernel = _make_hemis_kernel(M, half=C, split_axis=0)
        dims = ("parallel", "parallel")

    out = pl.pallas_call(
        kernel,
        grid=grid,
        in_specs=in_specs,
        out_specs=out_specs,
        out_shape=out_shape,
        compiler_params=pltpu.CompilerParams(
            dimension_semantics=dims,
            vmem_limit_bytes=vmem_limit,
        ),
        cost_estimate=pl.CostEstimate(
            flops=(4 * M + 2) * N * F,
            transcendentals=0,
            bytes_accessed=(M + 2) * N * F * itemsize,
        ),
    )(*xs)

    # Both output layouts are byte-identical to cat([mean, var], dim=1) in
    # NCHW, so this reshape is free (no data movement).
    return out.reshape(N, 2 * C, H, W)


# --------------------------------------------------------------------------
# Self-test
# --------------------------------------------------------------------------
if __name__ == "__main__":
    key = jax.random.PRNGKey(0)

    def _reference(x_list):
        xs = jnp.stack(x_list, axis=0)
        return jnp.concatenate(
            [jnp.mean(xs, axis=0), jnp.var(xs, axis=0, ddof=1)], axis=1)

    configs = [
        (3, 2, 4, 16, 16),   # demo shape  -> Path A, lane-dense (N, 2F) output
        (3, 2, 8, 16, 16),   # small batch -> Path B, sublane-dense (C, bf) blocks
        (2, 16, 4, 8, 8),    # batched     -> Path A, multi-step parallel grid
    ]
    for idx, (M, N, C, H, W) in enumerate(configs):
        keys = jax.random.split(jax.random.fold_in(key, idx), M)
        x_list = [jax.random.normal(k, (N, C, H, W), dtype=jnp.float32)
                  for k in keys]

        out = jax.block_until_ready(hemis_abstraction_block(x_list))
        ref = _reference(x_list)

        assert out.shape == (N, 2 * C, H, W), (out.shape, (N, 2 * C, H, W))
        assert jnp.allclose(out, ref, atol=1e-5, rtol=1e-5), (
            (M, N, C, H, W), float(jnp.max(jnp.abs(out - ref))))

    print("KERNEL_OK")
</pallas_src>

<mosaic_0001>
module attributes {stable_mosaic.version = 11 : i64} {
  func.func @kernel(%arg0: i32, %arg1: memref<2x1024xf32, #tpu.memory_space<vmem>>, %arg2: memref<2x1024xf32, #tpu.memory_space<vmem>>, %arg3: memref<2x1024xf32, #tpu.memory_space<vmem>>, %arg4: memref<2x2048xf32, #tpu.memory_space<vmem>>) attributes {dimension_semantics = [#tpu.dimension_semantics<parallel>], iteration_bounds = array<i64: 1>, scalar_prefetch = 0 : i64, scratch_operands = 0 : i64, tpu.core_type = #tpu.core_type<tc>, window_params = [{transform_indices = @transform_0, window_bounds = array<i64: 2, 1024>}, {transform_indices = @transform_1, window_bounds = array<i64: 2, 1024>}, {transform_indices = @transform_2, window_bounds = array<i64: 2, 1024>}, {transform_indices = @transform_3, window_bounds = array<i64: 2, 2048>}]} {
    %c0 = arith.constant 0 : index
    %c0_0 = arith.constant 0 : index
    %0 = vector.load %arg1[%c0, %c0_0] : memref<2x1024xf32, #tpu.memory_space<vmem>>, vector<2x1024xf32>
    %c0_1 = arith.constant 0 : index
    %c0_2 = arith.constant 0 : index
    %1 = vector.load %arg2[%c0_1, %c0_2] : memref<2x1024xf32, #tpu.memory_space<vmem>>, vector<2x1024xf32>
    %2 = arith.addf %0, %1 : vector<2x1024xf32>
    %c0_3 = arith.constant 0 : index
    %c0_4 = arith.constant 0 : index
    %3 = vector.load %arg3[%c0_3, %c0_4] : memref<2x1024xf32, #tpu.memory_space<vmem>>, vector<2x1024xf32>
    %4 = arith.addf %2, %3 : vector<2x1024xf32>
    %cst = arith.constant 0.333333343 : f32
    %5 = vector.broadcast %cst : f32 to vector<2x1024xf32>
    %6 = arith.mulf %4, %5 : vector<2x1024xf32>
    %cst_5 = arith.constant 0.000000e+00 : f32
    %7 = vector.broadcast %cst_5 : f32 to vector<2x1024xf32>
    %c0_6 = arith.constant 0 : index
    %c0_7 = arith.constant 0 : index
    %8 = vector.load %arg1[%c0_6, %c0_7] : memref<2x1024xf32, #tpu.memory_space<vmem>>, vector<2x1024xf32>
    %9 = arith.subf %8, %6 : vector<2x1024xf32>
    %10 = arith.mulf %9, %9 : vector<2x1024xf32>
    %11 = arith.addf %7, %10 : vector<2x1024xf32>
    %c0_8 = arith.constant 0 : index
    %c0_9 = arith.constant 0 : index
    %12 = vector.load %arg2[%c0_8, %c0_9] : memref<2x1024xf32, #tpu.memory_space<vmem>>, vector<2x1024xf32>
    %13 = arith.subf %12, %6 : vector<2x1024xf32>
    %14 = arith.mulf %13, %13 : vector<2x1024xf32>
    %15 = arith.addf %11, %14 : vector<2x1024xf32>
    %c0_10 = arith.constant 0 : index
    %c0_11 = arith.constant 0 : index
    %16 = vector.load %arg3[%c0_10, %c0_11] : memref<2x1024xf32, #tpu.memory_space<vmem>>, vector<2x1024xf32>
    %17 = arith.subf %16, %6 : vector<2x1024xf32>
    %18 = arith.mulf %17, %17 : vector<2x1024xf32>
    %19 = arith.addf %15, %18 : vector<2x1024xf32>
    %cst_12 = arith.constant 5.000000e-01 : f32
    %20 = vector.broadcast %cst_12 : f32 to vector<2x1024xf32>
    %21 = arith.mulf %19, %20 : vector<2x1024xf32>
    %c0_13 = arith.constant 0 : index
    %c0_14 = arith.constant 0 : index
    %22 = vector.load %arg4[%c0_13, %c0_14] : memref<2x2048xf32, #tpu.memory_space<vmem>>, vector<2x1024xf32>
    tpu.vector_store %arg4[%c0_13, %c0_14], %6 {strides = array<i32>} : memref<2x2048xf32, #tpu.memory_space<vmem>>, vector<2x1024xf32>,
    %c0_15 = arith.constant 0 : index
    %c1024 = arith.constant 1024 : index
    %23 = vector.load %arg4[%c0_15, %c1024] : memref<2x2048xf32, #tpu.memory_space<vmem>>, vector<2x1024xf32>
    tpu.vector_store %arg4[%c0_15, %c1024], %21 {strides = array<i32>} : memref<2x2048xf32, #tpu.memory_space<vmem>>, vector<2x1024xf32>,
    return
  }
  func.func @transform_0(%arg0: i32) -> (i32, i32) {
    %c0_i32 = arith.constant 0 : i32
    %c0_i32_0 = arith.constant 0 : i32
    return %arg0, %c0_i32 : i32, i32
  }
  func.func @transform_1(%arg0: i32) -> (i32, i32) {
    %c0_i32 = arith.constant 0 : i32
    %c0_i32_0 = arith.constant 0 : i32
    return %arg0, %c0_i32 : i32, i32
  }
  func.func @transform_2(%arg0: i32) -> (i32, i32) {
    %c0_i32 = arith.constant 0 : i32
    %c0_i32_0 = arith.constant 0 : i32
    return %arg0, %c0_i32 : i32, i32
  }
  func.func @transform_3(%arg0: i32) -> (i32, i32) {
    %c0_i32 = arith.constant 0 : i32
    %c0_i32_0 = arith.constant 0 : i32
    return %arg0, %c0_i32 : i32, i32
  }
}

</mosaic_0001>

<llo_original>
// kernel: tpu_custom_call.1
$region0: #{tpu_custom_call.1}
  #allocation0 [shape = 'u32[]', space=smem, size = 0x4, offset = 0x4, fixed_abs, tag = 'smem constant byte address 0x4 - core index']
  #allocation1 [shape = 'u32[144,128]{1,0:T(1,128)}', space=vmem, size = 0x12000, scoped, tag = 'internal scratch']
  %s0 = inlined_call_operand.hbm [shape: f32[2,1024], index: 0, kind: input, shape index: {}]
  %s1 = inlined_call_operand.hbm [shape: f32[2,1024], index: 1, kind: input, shape index: {}]
  %s2 = inlined_call_operand.hbm [shape: f32[2,1024], index: 2, kind: input, shape index: {}]
  %s3 = inlined_call_operand.hbm [shape: f32[2,2048], index: 3, kind: output, shape index: {}]
  %s4 = sld [smem:[#allocation0]]
  $region34: #{tpu_custom_call.1} parent=0
    _
  %s6 = ssub.s32 1, %s4
  %s7 = scalar_select 0, %s6, %s4
  $region1: #{tpu_custom_call.1} parent=0
    #allocation2 [shape = 'u8[8192]{0}', space=vmem, size = 0x2000, scoped, tag = 'input window, operand 0, single buffered']
    #allocation3 [shape = 's32[1]{0}', space=sflag, size = 0x4, scoped, tag = 'scoped memory for tpu_custom_call.1']
    #allocation4 [shape = 's32[1]{0}', space=sflag, size = 0x4, scoped, tag = 'scoped memory for tpu_custom_call.1']
    #allocation5 [shape = 'u8[8192]{0}', space=vmem, size = 0x2000, scoped, tag = 'input window, operand 1, single buffered']
    #allocation6 [shape = 's32[1]{0}', space=sflag, size = 0x4, scoped, tag = 'scoped memory for tpu_custom_call.1']
    #allocation7 [shape = 'u8[8192]{0}', space=vmem, size = 0x2000, scoped, tag = 'input window, operand 2, single buffered']
    #allocation8 [shape = 'u8[16384]{0}', space=vmem, size = 0x4000, scoped, tag = 'output window, operand 0, single buffered']
    %8 = vsyncpa [#allocation3], 0
    %9 = vsyncpa [#allocation6], 0
    %10 = vsyncpa [#allocation4], 0
    // Predicated region
    $region2: #{tpu_custom_call.1} parent=1 // pred_check
      _
    $region3: #{tpu_custom_call.1} parent=1 // pred_check_branch
      %12 = sbr.rel (0) target = $region5
    $region4: #{tpu_custom_call.1} parent=1 // pred_region
      %s14 = ssub.s32 256, 256
      %15 = vsyncadd [#allocation3], %s14
      %s17 = sshll.u32 [#allocation2], 4
      %s18 = int_to_ptr.vmem [resolvable:$true] %s17
      %20 = dma.hbm_to_vmem [thread:$0]  %s0, 256, %s18, [#allocation3]
    $region5: #{tpu_custom_call.1} parent=1 // pred_fallthru
      _
    // Predicated region
    $region6: #{tpu_custom_call.1} parent=1 // pred_check
      _
    $region7: #{tpu_custom_call.1} parent=1 // pred_check_branch
      %22 = sbr.rel (0) target = $region9
    $region8: #{tpu_custom_call.1} parent=1 // pred_region
      %s24 = ssub.s32 256, 256
      %25 = vsyncadd [#allocation6], %s24
      %s27 = sshll.u32 [#allocation5], 4
      %s28 = int_to_ptr.vmem [resolvable:$true] %s27
      %30 = dma.hbm_to_vmem [thread:$0]  %s1, 256, %s28, [#allocation6]
    $region9: #{tpu_custom_call.1} parent=1 // pred_fallthru
      _
    // Predicated region
    $region10: #{tpu_custom_call.1} parent=1 // pred_check
      _
    $region11: #{tpu_custom_call.1} parent=1 // pred_check_branch
      %32 = sbr.rel (0) target = $region13
    $region12: #{tpu_custom_call.1} parent=1 // pred_region
      %s34 = ssub.s32 256, 256
      %35 = vsyncadd [#allocation6], %s34
      %s37 = sshll.u32 [#allocation7], 4
      %s38 = int_to_ptr.vmem [resolvable:$true] %s37
      %40 = dma.hbm_to_vmem [thread:$0]  %s2, 256, %s38, [#allocation6]
    $region13: #{tpu_custom_call.1} parent=1 // pred_fallthru
      _
    // Predicated region
    $region14: #{tpu_custom_call.1} parent=1 // pred_check
      _
    $region15: #{tpu_custom_call.1} parent=1 // pred_check_branch
      %42 = sbr.rel (0) target = $region17
    $region16: #{tpu_custom_call.1} parent=1 // pred_region
      %43 = dma.done [#allocation3], 256
    $region17: #{tpu_custom_call.1} parent=1 // pred_fallthru
      _
    // Predicated region
    $region18: #{tpu_custom_call.1} parent=1 // pred_check
      _
    $region19: #{tpu_custom_call.1} parent=1 // pred_check_branch
      %45 = sbr.rel (0) target = $region21
    $region20: #{tpu_custom_call.1} parent=1 // pred_region
      %46 = dma.done [#allocation6], 256
    $region21: #{tpu_custom_call.1} parent=1 // pred_fallthru
      _
    // Predicated region
    $region22: #{tpu_custom_call.1} parent=1 // pred_check
      _
    $region23: #{tpu_custom_call.1} parent=1 // pred_check_branch
      %48 = sbr.rel (0) target = $region25
    $region24: #{tpu_custom_call.1} parent=1 // pred_region
      %49 = dma.done [#allocation6], 256
    $region25: #{tpu_custom_call.1} parent=1 // pred_fallthru
      _
    %v50 = vld [vmem:[#allocation2] sm:$0xff]
    %v51 = vld [vmem:[#allocation2 + $0x8] sm:$0xff]
    %v52 = vld [vmem:[#allocation5] sm:$0xff]
    %v53 = vld [vmem:[#allocation5 + $0x8] sm:$0xff]
    %v54 = vadd.f32 %v50, %v52
    %v55 = vadd.f32 %v51, %v53
    %v56 = vld [vmem:[#allocation7] sm:$0xff]
    %v57 = vld [vmem:[#allocation7 + $0x8] sm:$0xff]
    %v58 = vadd.f32 %v54, %v56
    %v59 = vadd.f32 %v55, %v57
    %v60 = vmul.f32 %v58, 0.33333334
    %v61 = vmul.f32 %v59, 0.33333334
    %v62 = vsub.f32 %v50, %v60
    %v63 = vsub.f32 %v51, %v61
    %v64 = vmul.f32 %v62, %v62
    %v65 = vmul.f32 %v63, %v63
    %v66 = vadd.f32 %v64, 0.0
    %v67 = vadd.f32 %v65, 0.0
    %v68 = vsub.f32 %v52, %v60
    %v69 = vsub.f32 %v53, %v61
    %v70 = vmul.f32 %v68, %v68
    %v71 = vmul.f32 %v69, %v69
    %v72 = vadd.f32 %v66, %v70
    %v73 = vadd.f32 %v67, %v71
    %v74 = vsub.f32 %v56, %v60
    %v75 = vsub.f32 %v57, %v61
    %v76 = vmul.f32 %v74, %v74
    %v77 = vmul.f32 %v75, %v75
    %v78 = vadd.f32 %v72, %v76
    %v79 = vadd.f32 %v73, %v77
    %v80 = vmul.f32 %v78, 0.5
    %v81 = vmul.f32 %v79, 0.5
    %82 = vst [vmem:[#allocation8] sm:$0xff] %v60
    %83 = vst [vmem:[#allocation8 + $0x8] sm:$0xff] %v61
    %84 = vst [vmem:[#allocation8 + $0x10] sm:$0xff] %v80
    %85 = vst [vmem:[#allocation8 + $0x18] sm:$0xff] %v81
    // Predicated region
    $region26: #{tpu_custom_call.1} parent=1 // pred_check
      _
    $region27: #{tpu_custom_call.1} parent=1 // pred_check_branch
      %87 = sbr.rel (0) target = $region29
    $region28: #{tpu_custom_call.1} parent=1 // pred_region
      %s89 = ssub.s32 512, 512
      %90 = vsyncadd [#allocation4], %s89
      %s92 = sshll.u32 [#allocation8], 4
      %s93 = int_to_ptr.vmem [resolvable:$true] %s92
      %95 = dma.vmem_to_hbm [thread:$0]  %s93, 512, %s3, [#allocation4]
    $region29: #{tpu_custom_call.1} parent=1 // pred_fallthru
      _
    // Predicated region
    $region30: #{tpu_custom_call.1} parent=1 // pred_check
      _
    $region31: #{tpu_custom_call.1} parent=1 // pred_check_branch
      %97 = sbr.rel (0) target = $region33
    $region32: #{tpu_custom_call.1} parent=1 // pred_region
      %98 = dma.done [#allocation4], 512
    $region33: #{tpu_custom_call.1} parent=1 // pred_fallthru
      _
    %99 = vsyncpa [#allocation3], 1
    %100 = vsyncpa [#allocation6], 1
    %101 = vsyncpa [#allocation4], 1

</llo_original>
